<compile_context>
chip_gen: v7x
topology: tpu7x:2x2x1
jax: 0.10.0
libtpu: 0.0.40
codegen_flags: <defaults>
</compile_context>

<pallas_src>
import jax
import jax.numpy as jnp
import numpy as np
from jax import lax
from jax.experimental import pallas as pl
from jax.experimental.pallas import tpu as pltpu


# ---------------------------------------------------------------------------
# One-time host-side weight packing (hoisted out of the jitted forward)
# ---------------------------------------------------------------------------
def pack_conv3x3_weights(w_oihw, w_in):
    """torch OIHW (Cout, Cin, 3, 3) -> ((w_in+2)*Cin, 3*2*Wo*Cout) banded f32 matrix.

    With XP[h, wp*Cin + ci] the zero-padded input rows and Y = XP @ PACKED,
        conv[h, w=2*wo+q, co] = sum_{kh=0..2} Y[h+kh, kh*n + q*half + wo*Cout + co]
    where n = 2*Wo*Cout, half = Wo*Cout.  So the whole 3x3 conv is one matmul plus two
    sublane-shifted adds, and even/odd output columns occupy the two lane halves
    (the horizontal 2x1 pool becomes a max of lane halves).
    """
    w = np.asarray(w_oihw, dtype=np.float32)
    cout, cin, kh_, kw_ = w.shape
    assert (kh_, kw_) == (3, 3) and w_in % 2 == 0
    wo = w_in // 2
    half = wo * cout
    n = 2 * half
    wt = np.transpose(w, (2, 3, 1, 0))                        # (3, 3, Cin, Cout)
    packed = np.zeros(((w_in + 2) * cin, 3 * n), dtype=np.float32)
    for kh in range(3):
        for kw in range(3):
            for col in range(w_in):                           # conv output column
                wp = col + kw                                 # padded input column
                c0 = kh * n + (col % 2) * half + (col // 2) * cout
                packed[wp * cin:(wp + 1) * cin, c0:c0 + cout] = wt[kh, kw]
    return packed


def pack_simple_cnn_params(w1, b1, w2, b2, H, W):
    """Pre-pack weights/biases once at parameter-setup time (not per forward call)."""
    wo1, wo2 = W // 2, W // 4
    w1p = jnp.asarray(pack_conv3x3_weights(w1, W), dtype=jnp.bfloat16)
    w2p = jnp.asarray(pack_conv3x3_weights(w2, W // 2), dtype=jnp.bfloat16)
    b1t = jnp.asarray(np.tile(np.asarray(b1, np.float32), wo1)[None, :])   # (1, Wo1*C1)
    b2t = jnp.asarray(np.tile(np.asarray(b2, np.float32), wo2)[None, :])   # (1, Wo2*C2)
    return w1p, b1t, w2p, b2t


# ---------------------------------------------------------------------------
# Fused two-layer kernel + wrapper
# ---------------------------------------------------------------------------
def make_simple_cnn_forward(H, W, c0, c1, c2):
    ho1, wo1 = H // 2, W // 2
    ho2, wo2 = ho1 // 2, wo1 // 2
    half1, half2 = wo1 * c1, wo2 * c2          # 64 / 64 -> n1 = n2 = 128 (lane-dense acc)
    n1, n2 = 2 * half1, 2 * half2
    cs_w = max(half1, half2)

    def kernel(xp_ref, w1_ref, b1_ref, w2_ref, b2_ref, o_ref, cs_ref, xp2_ref):
        # xp_ref : (H+2, (W+2)*c0)     bf16 zero-padded input image (W folded into lanes)
        # w1_ref : ((W+2)*c0, 3*n1)    bf16 banded packed conv1 weights
        # b1_ref : (1, half1)          f32  conv1 bias tiled over Wo1
        # w2_ref : ((wo1+2)*c1, 3*n2)  bf16 banded packed conv2 weights
        # b2_ref : (1, half2)          f32  conv2 bias tiled over Wo2
        # o_ref  : (ho2, half2)        f32  final pooled output
        # cs_ref : (H, cs_w)           f32  pool staging scratch
        # xp2_ref: (ho1+2, (wo1+2)*c1) f32  padded layer-2 input scratch

        # ------- layer 1: conv3x3(c0->c1) + bias + ReLU + maxpool 2x2 -------
        y1 = jnp.dot(xp_ref[...], w1_ref[...],
                     preferred_element_type=jnp.float32)            # (H+2, 3*n1)
        conv1 = (y1[0:H, 0:n1] + y1[1:H + 1, n1:2 * n1]
                 + y1[2:H + 2, 2 * n1:3 * n1])                      # (H, n1) f32
        h1 = jnp.maximum(conv1[:, 0:half1], conv1[:, half1:n1])     # horizontal pool
        cs_ref[0:H, 0:half1] = h1
        v1 = jnp.maximum(cs_ref[pl.ds(0, ho1, stride=2), pl.ds(0, half1)],
                         cs_ref[pl.ds(1, ho1, stride=2), pl.ds(0, half1)])  # vertical pool
        a1 = jnp.maximum(v1 + b1_ref[...], 0.0)                     # bias+ReLU post-pool

        # ------- re-pad pooled activation into layer-2 input scratch (stays in VMEM) ---
        xp2_ref[...] = jnp.zeros_like(xp2_ref)
        xp2_ref[1:1 + ho1, c1:c1 + half1] = a1

        # ------- layer 2: conv3x3(c1->c2) + bias + ReLU + maxpool 2x2 -------
        y2 = jnp.dot(xp2_ref[...].astype(jnp.bfloat16), w2_ref[...],
                     preferred_element_type=jnp.float32)            # (ho1+2, 3*n2)
        conv2 = (y2[0:ho1, 0:n2] + y2[1:ho1 + 1, n2:2 * n2]
                 + y2[2:ho1 + 2, 2 * n2:3 * n2])                    # (ho1, n2)
        h2 = jnp.maximum(conv2[:, 0:half2], conv2[:, half2:n2])
        cs_ref[0:ho1, 0:half2] = h2
        v2 = jnp.maximum(cs_ref[pl.ds(0, ho2, stride=2), pl.ds(0, half2)],
                         cs_ref[pl.ds(1, ho2, stride=2), pl.ds(0, half2)])
        o_ref[...] = jnp.maximum(v2 + b2_ref[...], 0.0).astype(o_ref.dtype)

    def forward(x_nchw, packed):
        w1p, b1t, w2p, b2t = packed
        N = x_nchw.shape[0]
        x = jnp.transpose(x_nchw, (0, 2, 3, 1))                     # NCHW -> NHWC
        xp = jnp.pad(x, ((0, 0), (1, 1), (1, 1), (0, 0)))
        xp = xp.reshape(N, H + 2, (W + 2) * c0).astype(jnp.bfloat16)

        out = pl.pallas_call(
            kernel,
            out_shape=jax.ShapeDtypeStruct((N, ho2, half2), jnp.float32),
            grid=(N,),
            in_specs=[
                pl.BlockSpec((None, H + 2, (W + 2) * c0), lambda i: (i, 0, 0)),
                pl.BlockSpec(((W + 2) * c0, 3 * n1), lambda i: (0, 0)),
                pl.BlockSpec((1, half1), lambda i: (0, 0)),
                pl.BlockSpec(((wo1 + 2) * c1, 3 * n2), lambda i: (0, 0)),
                pl.BlockSpec((1, half2), lambda i: (0, 0)),
            ],
            out_specs=pl.BlockSpec((None, ho2, half2), lambda i: (i, 0, 0)),
            scratch_shapes=[
                pltpu.VMEM((H, cs_w), jnp.float32),                   # pool staging
                pltpu.VMEM((ho1 + 2, (wo1 + 2) * c1), jnp.float32),   # padded layer-2 input
            ],
            compiler_params=pltpu.CompilerParams(
                dimension_semantics=("parallel",)),
        )(xp, w1p, b1t, w2p, b2t)

        return jnp.transpose(out.reshape(N, ho2, wo2, c2), (0, 3, 1, 2))   # NHWC -> NCHW

    return forward


# ---------------------------------------------------------------------------
# Pure-JAX reference (mirrors the PyTorch forward) for a sanity check
# ---------------------------------------------------------------------------
def reference_forward(x, params):
    w1, b1, w2, b2 = params
    dn = ("NCHW", "OIHW", "NCHW")

    def block(y, w, b):
        y = lax.conv_general_dilated(y, w, (1, 1), ((1, 1), (1, 1)),
                                     dimension_numbers=dn)
        y = jax.nn.relu(y + b[None, :, None, None])
        return lax.reduce_window(y, -jnp.inf, lax.max,
                                 (1, 1, 2, 2), (1, 1, 2, 2), "VALID")

    return block(block(x, w1, b1), w2, b2)


if __name__ == "__main__":
    key = jax.random.PRNGKey(0)
    kx, k1, k2, k3, k4 = jax.random.split(key, 5)

    # Deterministic synthetic parameters (shapes from SimpleCNN.__init__)
    w1 = 0.1 * jax.random.normal(k1, (8, 3, 3, 3), dtype=jnp.float32)    # conv1 weight
    b1 = 0.1 * jax.random.normal(k2, (8,), dtype=jnp.float32)            # conv1 bias
    w2 = 0.1 * jax.random.normal(k3, (16, 8, 3, 3), dtype=jnp.float32)   # conv2 weight
    b2 = 0.1 * jax.random.normal(k4, (16,), dtype=jnp.float32)           # conv2 bias

    x = jax.random.normal(kx, (2, 3, 16, 16), dtype=jnp.float32)         # NCHW input

    packed = pack_simple_cnn_params(w1, b1, w2, b2, 16, 16)   # once, outside the forward
    fwd = jax.jit(make_simple_cnn_forward(16, 16, 3, 8, 16))

    out = jax.block_until_ready(fwd(x, packed))
    assert out.shape == (2, 16, 4, 4), out.shape

    ref = jax.block_until_ready(reference_forward(x, (w1, b1, w2, b2)))
    err = float(jnp.max(jnp.abs(out - ref)))
    assert jnp.allclose(out, ref, atol=5e-2, rtol=5e-2), err

    print("KERNEL_OK")
</pallas_src>

<mosaic_0001>
module attributes {stable_mosaic.version = 11 : i64} {
  func.func @kernel(%arg0: i32, %arg1: memref<1x18x54xbf16, #tpu.memory_space<vmem>>, %arg2: memref<54x384xbf16, #tpu.memory_space<vmem>>, %arg3: memref<1x64xf32, #tpu.memory_space<vmem>>, %arg4: memref<80x384xbf16, #tpu.memory_space<vmem>>, %arg5: memref<1x64xf32, #tpu.memory_space<vmem>>, %arg6: memref<1x4x64xf32, #tpu.memory_space<vmem>>, %arg7: memref<16x64xf32, #tpu.memory_space<vmem>>, %arg8: memref<10x80xf32, #tpu.memory_space<vmem>>) attributes {dimension_semantics = [#tpu.dimension_semantics<parallel>], iteration_bounds = array<i64: 2>, scalar_prefetch = 0 : i64, scratch_operands = 2 : i64, tpu.core_type = #tpu.core_type<tc>, window_params = [{transform_indices = @transform_0, window_bounds = array<i64: 1, 18, 54>}, {pipeline_mode = #tpu.pipeline_mode<synchronous>, transform_indices = @transform_1, window_bounds = array<i64: 54, 384>}, {pipeline_mode = #tpu.pipeline_mode<synchronous>, transform_indices = @transform_2, window_bounds = array<i64: 1, 64>}, {pipeline_mode = #tpu.pipeline_mode<synchronous>, transform_indices = @transform_3, window_bounds = array<i64: 80, 384>}, {pipeline_mode = #tpu.pipeline_mode<synchronous>, transform_indices = @transform_4, window_bounds = array<i64: 1, 64>}, {transform_indices = @transform_5, window_bounds = array<i64: 1, 4, 64>}]} {
    %c0 = arith.constant 0 : index
    %c0_0 = arith.constant 0 : index
    %c0_1 = arith.constant 0 : index
    %0 = vector.load %arg1[%c0, %c0_0, %c0_1] : memref<1x18x54xbf16, #tpu.memory_space<vmem>>, vector<1x18x54xbf16>
    %1 = vector.shape_cast %0 : vector<1x18x54xbf16> to vector<18x54xbf16>
    %c0_2 = arith.constant 0 : index
    %c0_3 = arith.constant 0 : index
    %2 = vector.load %arg2[%c0_2, %c0_3] : memref<54x384xbf16, #tpu.memory_space<vmem>>, vector<54x384xbf16>
    %cst = arith.constant dense<0.000000e+00> : vector<18x384xf32>
    %3 = tpu.matmul %1, %2, %cst {dimension_numbers = #tpu.dot_dimension_numbers<[1], [0], [0], [1], [0, 0, 1, 1], [], []>} : vector<18x54xbf16>, vector<54x384xbf16>, vector<18x384xf32> -> vector<18x384xf32>
    %4 = vector.extract_strided_slice %3 {offsets = [0, 0], sizes = [16, 128], strides = [1, 1]} : vector<18x384xf32> to vector<16x128xf32>
    %5 = vector.extract_strided_slice %3 {offsets = [1, 128], sizes = [16, 128], strides = [1, 1]} : vector<18x384xf32> to vector<16x128xf32>
    %6 = arith.addf %4, %5 : vector<16x128xf32>
    %7 = vector.extract_strided_slice %3 {offsets = [2, 256], sizes = [16, 128], strides = [1, 1]} : vector<18x384xf32> to vector<16x128xf32>
    %8 = arith.addf %6, %7 : vector<16x128xf32>
    %9 = vector.extract_strided_slice %8 {offsets = [0, 0], sizes = [16, 64], strides = [1, 1]} : vector<16x128xf32> to vector<16x64xf32>
    %10 = vector.extract_strided_slice %8 {offsets = [0, 64], sizes = [16, 64], strides = [1, 1]} : vector<16x128xf32> to vector<16x64xf32>
    %11 = arith.maximumf %9, %10 : vector<16x64xf32>
    %c0_4 = arith.constant 0 : index
    %c0_5 = arith.constant 0 : index
    %12 = vector.load %arg7[%c0_4, %c0_5] : memref<16x64xf32, #tpu.memory_space<vmem>>, vector<16x64xf32>
    tpu.vector_store %arg7[%c0_4, %c0_5], %11 {strides = array<i32>} : memref<16x64xf32, #tpu.memory_space<vmem>>, vector<16x64xf32>,
    %c0_6 = arith.constant 0 : index
    %c0_7 = arith.constant 0 : index
    %13 = tpu.strided_load %arg7[%c0_6, %c0_7] {strides = array<i32: 2, 1>} : memref<16x64xf32, #tpu.memory_space<vmem>>, vector<8x64xf32>
    %c1 = arith.constant 1 : index
    %c0_8 = arith.constant 0 : index
    %14 = tpu.strided_load %arg7[%c1, %c0_8] {strides = array<i32: 2, 1>} : memref<16x64xf32, #tpu.memory_space<vmem>>, vector<8x64xf32>
    %15 = arith.maximumf %13, %14 : vector<8x64xf32>
    %c0_9 = arith.constant 0 : index
    %c0_10 = arith.constant 0 : index
    %16 = vector.load %arg3[%c0_9, %c0_10] : memref<1x64xf32, #tpu.memory_space<vmem>>, vector<1x64xf32>
    %17 = vector.broadcast %16 : vector<1x64xf32> to vector<8x64xf32>
    %18 = arith.addf %15, %17 : vector<8x64xf32>
    %cst_11 = arith.constant 0.000000e+00 : f32
    %19 = vector.broadcast %cst_11 : f32 to vector<8x64xf32>
    %20 = arith.maximumf %18, %19 : vector<8x64xf32>
    %cst_12 = arith.constant 0.000000e+00 : f32
    %21 = vector.broadcast %cst_12 : f32 to vector<10x80xf32>
    %c0_13 = arith.constant 0 : index
    %c0_14 = arith.constant 0 : index
    %22 = vector.load %arg8[%c0_13, %c0_14] : memref<10x80xf32, #tpu.memory_space<vmem>>, vector<10x80xf32>
    tpu.vector_store %arg8[%c0_13, %c0_14], %21 {strides = array<i32>} : memref<10x80xf32, #tpu.memory_space<vmem>>, vector<10x80xf32>,
    %c1_15 = arith.constant 1 : index
    %c8 = arith.constant 8 : index
    %23 = vector.load %arg8[%c1_15, %c8] : memref<10x80xf32, #tpu.memory_space<vmem>>, vector<8x64xf32>
    tpu.vector_store %arg8[%c1_15, %c8], %20 {strides = array<i32>} : memref<10x80xf32, #tpu.memory_space<vmem>>, vector<8x64xf32>,
    %c0_16 = arith.constant 0 : index
    %c0_17 = arith.constant 0 : index
    %24 = vector.load %arg8[%c0_16, %c0_17] : memref<10x80xf32, #tpu.memory_space<vmem>>, vector<10x80xf32>
    %25 = arith.truncf %24 : vector<10x80xf32> to vector<10x80xbf16>
    %c0_18 = arith.constant 0 : index
    %c0_19 = arith.constant 0 : index
    %26 = vector.load %arg4[%c0_18, %c0_19] : memref<80x384xbf16, #tpu.memory_space<vmem>>, vector<80x384xbf16>
    %cst_20 = arith.constant dense<0.000000e+00> : vector<10x384xf32>
    %27 = tpu.matmul %25, %26, %cst_20 {dimension_numbers = #tpu.dot_dimension_numbers<[1], [0], [0], [1], [0, 0, 1, 1], [], []>} : vector<10x80xbf16>, vector<80x384xbf16>, vector<10x384xf32> -> vector<10x384xf32>
    %28 = vector.extract_strided_slice %27 {offsets = [0, 0], sizes = [8, 128], strides = [1, 1]} : vector<10x384xf32> to vector<8x128xf32>
    %29 = vector.extract_strided_slice %27 {offsets = [1, 128], sizes = [8, 128], strides = [1, 1]} : vector<10x384xf32> to vector<8x128xf32>
    %30 = arith.addf %28, %29 : vector<8x128xf32>
    %31 = vector.extract_strided_slice %27 {offsets = [2, 256], sizes = [8, 128], strides = [1, 1]} : vector<10x384xf32> to vector<8x128xf32>
    %32 = arith.addf %30, %31 : vector<8x128xf32>
    %33 = vector.extract_strided_slice %32 {offsets = [0, 0], sizes = [8, 64], strides = [1, 1]} : vector<8x128xf32> to vector<8x64xf32>
    %34 = vector.extract_strided_slice %32 {offsets = [0, 64], sizes = [8, 64], strides = [1, 1]} : vector<8x128xf32> to vector<8x64xf32>
    %35 = arith.maximumf %33, %34 : vector<8x64xf32>
    %c0_21 = arith.constant 0 : index
    %c0_22 = arith.constant 0 : index
    %36 = vector.load %arg7[%c0_21, %c0_22] : memref<16x64xf32, #tpu.memory_space<vmem>>, vector<8x64xf32>
    tpu.vector_store %arg7[%c0_21, %c0_22], %35 {strides = array<i32>} : memref<16x64xf32, #tpu.memory_space<vmem>>, vector<8x64xf32>,
    %c0_23 = arith.constant 0 : index
    %c0_24 = arith.constant 0 : index
    %37 = tpu.strided_load %arg7[%c0_23, %c0_24] {strides = array<i32: 2, 1>} : memref<16x64xf32, #tpu.memory_space<vmem>>, vector<4x64xf32>
    %c1_25 = arith.constant 1 : index
    %c0_26 = arith.constant 0 : index
    %38 = tpu.strided_load %arg7[%c1_25, %c0_26] {strides = array<i32: 2, 1>} : memref<16x64xf32, #tpu.memory_space<vmem>>, vector<4x64xf32>
    %39 = arith.maximumf %37, %38 : vector<4x64xf32>
    %c0_27 = arith.constant 0 : index
    %c0_28 = arith.constant 0 : index
    %40 = vector.load %arg5[%c0_27, %c0_28] : memref<1x64xf32, #tpu.memory_space<vmem>>, vector<1x64xf32>
    %41 = vector.broadcast %40 : vector<1x64xf32> to vector<4x64xf32>
    %42 = arith.addf %39, %41 : vector<4x64xf32>
    %cst_29 = arith.constant 0.000000e+00 : f32
    %43 = vector.broadcast %cst_29 : f32 to vector<4x64xf32>
    %44 = arith.maximumf %42, %43 : vector<4x64xf32>
    %c0_30 = arith.constant 0 : index
    %c0_31 = arith.constant 0 : index
    %c0_32 = arith.constant 0 : index
    %45 = vector.load %arg6[%c0_30, %c0_31, %c0_32] : memref<1x4x64xf32, #tpu.memory_space<vmem>>, vector<1x4x64xf32>
    %46 = vector.shape_cast %45 : vector<1x4x64xf32> to vector<4x64xf32>
    %47 = vector.shape_cast %44 : vector<4x64xf32> to vector<1x4x64xf32>
    tpu.vector_store %arg6[%c0_30, %c0_31, %c0_32], %47 {strides = array<i32>} : memref<1x4x64xf32, #tpu.memory_space<vmem>>, vector<1x4x64xf32>,
    return
  }
  func.func @transform_0(%arg0: i32) -> (i32, i32, i32) {
    %c0_i32 = arith.constant 0 : i32
    %c0_i32_0 = arith.constant 0 : i32
    %c0_i32_1 = arith.constant 0 : i32
    return %arg0, %c0_i32, %c0_i32_0 : i32, i32, i32
  }
  func.func @transform_1(%arg0: i32) -> (i32, i32) {
    %c0_i32 = arith.constant 0 : i32
    %c0_i32_0 = arith.constant 0 : i32
    %c0_i32_1 = arith.constant 0 : i32
    return %c0_i32, %c0_i32_0 : i32, i32
  }
  func.func @transform_2(%arg0: i32) -> (i32, i32) {
    %c0_i32 = arith.constant 0 : i32
    %c0_i32_0 = arith.constant 0 : i32
    %c0_i32_1 = arith.constant 0 : i32
    return %c0_i32, %c0_i32_0 : i32, i32
  }
  func.func @transform_3(%arg0: i32) -> (i32, i32) {
    %c0_i32 = arith.constant 0 : i32
    %c0_i32_0 = arith.constant 0 : i32
    %c0_i32_1 = arith.constant 0 : i32
    return %c0_i32, %c0_i32_0 : i32, i32
  }
  func.func @transform_4(%arg0: i32) -> (i32, i32) {
    %c0_i32 = arith.constant 0 : i32
    %c0_i32_0 = arith.constant 0 : i32
    %c0_i32_1 = arith.constant 0 : i32
    return %c0_i32, %c0_i32_0 : i32, i32
  }
  func.func @transform_5(%arg0: i32) -> (i32, i32, i32) {
    %c0_i32 = arith.constant 0 : i32
    %c0_i32_0 = arith.constant 0 : i32
    %c0_i32_1 = arith.constant 0 : i32
    return %arg0, %c0_i32, %c0_i32_0 : i32, i32, i32
  }
}

</mosaic_0001>

<llo_original>
// kernel: forward.1
$region0: #{forward.1}
  #allocation0 [shape = 'u32[]', space=smem, size = 0x4, offset = 0x4, fixed_abs, tag = 'smem constant byte address 0x4 - core index']
  #allocation1 [shape = 'u32[144,128]{1,0:T(1,128)}', space=vmem, size = 0x12000, scoped, tag = 'internal scratch']
  #allocation2 [shape = 'f32[16,64]{1,0:T(8,128)}', space=vmem, size = 0x2000, scoped, tag = 'scratch operand']
  #allocation3 [shape = 'f32[10,80]{1,0:T(8,128)}', space=vmem, size = 0x2000, scoped, tag = 'scratch operand']
  %s0 = inlined_call_operand.vmem [shape: bf16[2,18,54], index: 0, kind: input, shape index: {}]
  %s1 = inlined_call_operand.vmem [shape: bf16[54,384], index: 1, kind: input, shape index: {}]
  %s2 = inlined_call_operand.vmem [shape: f32[1,64], index: 2, kind: input, shape index: {}]
  %s3 = inlined_call_operand.vmem [shape: bf16[80,384], index: 3, kind: input, shape index: {}]
  %s4 = inlined_call_operand.vmem [shape: f32[1,64], index: 4, kind: input, shape index: {}]
  %s5 = inlined_call_operand.vmem [shape: f32[2,4,64], index: 5, kind: output, shape index: {}]
  %s6 = sld [smem:[#allocation0]]
  $region53: #{forward.1} parent=0
    _
  %s8 = ssub.s32 1, %s6
  %s9 = scalar_select 0, %s8, %s6
  loop: start=0, step=1, limit=4
  $region2: #{forward.1} parent=0 // loop_pre_header
    _
  $region3: #{forward.1} parent=0 // loop_header
    %s11 = sphi 0, %s15
    %p12 = scmp.ge.s32.totalorder %s11, 4
    %s21 = sphi 0, %s23
    %s24 = sphi 0, %s21
    %s25 = sphi 0, %s24
    %s41 = sphi 0, %s25
    %s45 = sphi 0, %s45
    %s47 = sphi 0, %s45
    %s48 = sphi 0, %s47
    %s62 = sphi 0, %s48
    %s66 = sphi 0, %s66
    %s68 = sphi 0, %s66
    %s69 = sphi 0, %s68
    %s83 = sphi 0, %s69
    %s87 = sphi 0, %s87
    %s89 = sphi 0, %s87
    %s90 = sphi 0, %s89
    %s104 = sphi 0, %s90
    %s108 = sphi 0, %s108
    %s110 = sphi 0, %s108
    %s111 = sphi 0, %s110
    %s125 = sphi 0, %s111
    %s131 = sphi 0, %s133
    %s134 = sphi 0, %s131
    %s135 = sphi 0, %s134
    %s151 = sphi 0, %s135
  $region4: #{forward.1} parent=0 // loop_header_branch
    %14 = sbr.rel (%p12) target = $region8
  $region5: #{forward.1} parent=0 // loop_body
    %s16 = ssub.s32 %s11, 1
    %s17 = ssub.s32 %s11, 2
    %s18 = sadd.s32 %s11, 1
    %s19 = ssub.s32 %s11, %s18
    %p20 = scmp.eq.s32.totalorder %s19, 0
    %s22 = sadd.s32 %s21, 1
    %s23 = scalar_select %p20, %s21, %s22
    %p26 = pneg %p20
    %p27 = scmp.eq.s32.totalorder %s11, 1
    %p28 = por %p26, %p27
    %p29 = scmp.ne.s32.totalorder %s21, %s24
    %p30 = scmp.eq.s32.totalorder %s11, 0
    %p31 = por %p29, %p30
    %p32 = scmp.ne.s32.totalorder %s21, %s24
    %p33 = scmp.eq.s32.totalorder %s16, 1
    %p34 = por %p32, %p33
    %p35 = scmp.ne.s32.totalorder %s24, %s25
    %p36 = scmp.eq.s32.totalorder %s16, 0
    %p37 = por %p35, %p36
    %p38 = scmp.ne.s32.totalorder %s24, %s25
    %p39 = scmp.eq.s32.totalorder %s17, 1
    %p40 = por %p38, %p39
    %p42 = scmp.ne.s32.totalorder %s25, %s41
    %p43 = scmp.eq.s32.totalorder %s17, 0
    %p44 = por %p42, %p43
    %s46 = sadd.s32 %s45, 1
    %p49 = scmp.eq.s32.totalorder %s11, 1
    %p50 = scmp.ne.s32.totalorder %s45, %s47
    %p51 = scmp.eq.s32.totalorder %s11, 0
    %p52 = por %p50, %p51
    %p53 = scmp.ne.s32.totalorder %s45, %s47
    %p54 = scmp.eq.s32.totalorder %s16, 1
    %p55 = por %p53, %p54
    %p56 = scmp.ne.s32.totalorder %s47, %s48
    %p57 = scmp.eq.s32.totalorder %s16, 0
    %p58 = por %p56, %p57
    %p59 = scmp.ne.s32.totalorder %s47, %s48
    %p60 = scmp.eq.s32.totalorder %s17, 1
    %p61 = por %p59, %p60
    %p63 = scmp.ne.s32.totalorder %s48, %s62
    %p64 = scmp.eq.s32.totalorder %s17, 0
    %p65 = por %p63, %p64
    %s67 = sadd.s32 %s66, 1
    %p70 = scmp.eq.s32.totalorder %s11, 1
    %p71 = scmp.ne.s32.totalorder %s66, %s68
    %p72 = scmp.eq.s32.totalorder %s11, 0
    %p73 = por %p71, %p72
    %p74 = scmp.ne.s32.totalorder %s66, %s68
    %p75 = scmp.eq.s32.totalorder %s16, 1
    %p76 = por %p74, %p75
    %p77 = scmp.ne.s32.totalorder %s68, %s69
    %p78 = scmp.eq.s32.totalorder %s16, 0
    %p79 = por %p77, %p78
    %p80 = scmp.ne.s32.totalorder %s68, %s69
    %p81 = scmp.eq.s32.totalorder %s17, 1
    %p82 = por %p80, %p81
    %p84 = scmp.ne.s32.totalorder %s69, %s83
    %p85 = scmp.eq.s32.totalorder %s17, 0
    %p86 = por %p84, %p85
    %s88 = sadd.s32 %s87, 1
    %p91 = scmp.eq.s32.totalorder %s11, 1
    %p92 = scmp.ne.s32.totalorder %s87, %s89
    %p93 = scmp.eq.s32.totalorder %s11, 0
    %p94 = por %p92, %p93
    %p95 = scmp.ne.s32.totalorder %s87, %s89
    %p96 = scmp.eq.s32.totalorder %s16, 1
    %p97 = por %p95, %p96
    %p98 = scmp.ne.s32.totalorder %s89, %s90
    %p99 = scmp.eq.s32.totalorder %s16, 0
    %p100 = por %p98, %p99
    %p101 = scmp.ne.s32.totalorder %s89, %s90
    %p102 = scmp.eq.s32.totalorder %s17, 1
    %p103 = por %p101, %p102
    %p105 = scmp.ne.s32.totalorder %s90, %s104
    %p106 = scmp.eq.s32.totalorder %s17, 0
    %p107 = por %p105, %p106
    %s109 = sadd.s32 %s108, 1
    %p112 = scmp.eq.s32.totalorder %s11, 1
    %p113 = scmp.ne.s32.totalorder %s108, %s110
    %p114 = scmp.eq.s32.totalorder %s11, 0
    %p115 = por %p113, %p114
    %p116 = scmp.ne.s32.totalorder %s108, %s110
    %p117 = scmp.eq.s32.totalorder %s16, 1
    %p118 = por %p116, %p117
    %p119 = scmp.ne.s32.totalorder %s110, %s111
    %p120 = scmp.eq.s32.totalorder %s16, 0
    %p121 = por %p119, %p120
    %p122 = scmp.ne.s32.totalorder %s110, %s111
    %p123 = scmp.eq.s32.totalorder %s17, 1
    %p124 = por %p122, %p123
    %p126 = scmp.ne.s32.totalorder %s111, %s125
    %p127 = scmp.eq.s32.totalorder %s17, 0
    %p128 = por %p126, %p127
    %s129 = ssub.s32 %s11, %s18
    %p130 = scmp.eq.s32.totalorder %s129, 0
    %s132 = sadd.s32 %s131, 1
    %s133 = scalar_select %p130, %s131, %s132
    %p136 = pneg %p130
    %p137 = scmp.eq.s32.totalorder %s11, 1
    %p138 = por %p136, %p137
    %p139 = scmp.ne.s32.totalorder %s131, %s134
    %p140 = scmp.eq.s32.totalorder %s11, 0
    %p141 = por %p139, %p140
    %p142 = scmp.ne.s32.totalorder %s131, %s134
    %p143 = scmp.eq.s32.totalorder %s16, 1
    %p144 = por %p142, %p143
    %p145 = scmp.ne.s32.totalorder %s134, %s135
    %p146 = scmp.eq.s32.totalorder %s16, 0
    %p147 = por %p145, %p146
    %p148 = scmp.ne.s32.totalorder %s134, %s135
    %p149 = scmp.eq.s32.totalorder %s17, 1
    %p150 = por %p148, %p149
    %p152 = scmp.ne.s32.totalorder %s135, %s151
    %p153 = scmp.eq.s32.totalorder %s17, 0
    %p154 = por %p152, %p153
    %p155 = scmp.le.s32.totalorder 1, %s11
    %p156 = scmp.lt.s32.totalorder %s11, 3
    %p157 = pnand %p155, %p156
    %p158 = pneg %p157
    // Predicated region
    $region9: #{forward.1} parent=5 // pred_check
      _
    $region10: #{forward.1} parent=5 // pred_check_branch
      %160 = sbr.rel (%p157) target = $region12
    $region11: #{forward.1} parent=5 // pred_region
      %s161 = ssub.s32 %s11, 1
      // Predicated region
      $region13: #{forward.1} parent=11 // pred_check
        %p162 = pneg %p58
      $region14: #{forward.1} parent=11 // pred_check_branch
        %164 = sbr.rel (%p162) target = $region16
      $region15: #{forward.1} parent=11 // pred_region
        _
      $region16: #{forward.1} parent=11 // pred_fallthru
        _
      // Predicated region
      $region17: #{forward.1} parent=11 // pred_check
        %p165 = pneg %p79
      $region18: #{forward.1} parent=11 // pred_check_branch
        %167 = sbr.rel (%p165) target = $region20
      $region19: #{forward.1} parent=11 // pred_region
        _
      $region20: #{forward.1} parent=11 // pred_fallthru
        _
      // Predicated region
      $region21: #{forward.1} parent=11 // pred_check
        %p168 = pneg %p100
      $region22: #{forward.1} parent=11 // pred_check_branch
        %170 = sbr.rel (%p168) target = $region24
      $region23: #{forward.1} parent=11 // pred_region
        _
      $region24: #{forward.1} parent=11 // pred_fallthru
        _
      // Predicated region
      $region25: #{forward.1} parent=11 // pred_check
        %p171 = pneg %p121
      $region26: #{forward.1} parent=11 // pred_check_branch
        %173 = sbr.rel (%p171) target = $region28
      $region27: #{forward.1} parent=11 // pred_region
        _
      $region28: #{forward.1} parent=11 // pred_fallthru
        _
    $region12: #{forward.1} parent=5 // pred_fallthru
      _
    %p174 = scmp.lt.s32.totalorder %s11, 2
    // Predicated region
    $region29: #{forward.1} parent=5 // pred_check
      %p175 = pneg %p174
    $region30: #{forward.1} parent=5 // pred_check_branch
      %177 = sbr.rel (%p175) target = $region32
    $region31: #{forward.1} parent=5 // pred_region
      // Predicated region
      $region33: #{forward.1} parent=31 // pred_check
        %p178 = pneg %p31
      $region34: #{forward.1} parent=31 // pred_check_branch
        %180 = sbr.rel (%p178) target = $region36
      $region35: #{forward.1} parent=31 // pred_region
        %p181 = scmp.lt.s32.totalorder %s11, 1
        %s182 = scalar_select %p181, %s11, 1
        %s183 = smul.addr %s182, 3
        %s184 = smul.addr %s183, 4
        %s185 = scalar_lea.vmem %s0, %s184
      $region36: #{forward.1} parent=31 // pred_fallthru
        _
    $region32: #{forward.1} parent=5 // pred_fallthru
      _
    %p186 = scmp.le.s32.totalorder 1, %s11
    %p187 = scmp.lt.s32.totalorder %s11, 3
    %p188 = pnand %p186, %p187
    %p189 = pneg %p188
    // Predicated region
    $region37: #{forward.1} parent=5 // pred_check
      _
    $region38: #{forward.1} parent=5 // pred_check_branch
      %191 = sbr.rel (%p188) target = $region40
    $region39: #{forward.1} parent=5 // pred_region
      %s192 = ssub.s32 %s11, 1
      %p193 = scmp.lt.s32.totalorder %s16, 1
      %s194 = scalar_select %p193, %s16, 1
      %s195 = smul.addr %s194, 3
      %s196 = smul.addr %s195, 4
      %s197 = scalar_lea.vmem %s0, %s196
      %p198 = pneg %p37
      %p199 = pneg %p34
      %p200 = pneg %p58
      %p201 = pneg %p55
      %p202 = pneg %p79
      %p203 = pneg %p76
      %p204 = pneg %p100
      %p205 = pneg %p97
      %p206 = pneg %p121
      %p207 = pneg %p118
      %p208 = pneg %p147
      %p209 = pneg %p144
      %p210 = scmp.lt.s32.totalorder %s16, 1
      %s211 = scalar_select %p210, %s16, 1
      %s212 = smul.addr %s211, 4
      %s213 = scalar_lea.vmem %s5, %s212
      %p214 = scmp.lt.s32.totalorder %s16, 1
      %s215 = scalar_select %p214, %s16, 1
      %s216 = smul.addr %s215, 3
      %s217 = smul.addr %s216, 4
      %s218 = scalar_lea.vmem %s0, %s217
      %p219 = scmp.lt.s32.totalorder %s16, 1
      %s220 = scalar_select %p219, %s16, 1
      %s221 = smul.addr %s220, 4
      %s222 = scalar_lea.vmem %s5, %s221
      %v224 = vld [vmem:[%s218] sm:$0xf]
      %v225 = vld [vmem:[%s218 + $0x4] sm:$0xf]
      %v226 = vld [vmem:[%s218 + $0x8] sm:$0x1]
      %v227 = vld [vmem:[%s1] sm:$0xff]
      %v228 = vld [vmem:[%s1 + $0x8] sm:$0xf]
      %v229 = vld [vmem:[%s1 + $0xc] sm:$0xff]
      %v230 = vld [vmem:[%s1 + $0x14] sm:$0xf]
      %v231 = vld [vmem:[%s1 + $0x18] sm:$0xff]
      %v232 = vld [vmem:[%s1 + $0x20] sm:$0xf]
      %v233 = vld [vmem:[%s1 + $0x24] sm:$0xff]
      %v234 = vld [vmem:[%s1 + $0x2c] sm:$0xf]
      %v235 = vld [vmem:[%s1 + $0x30] sm:$0xff]
      %v236 = vld [vmem:[%s1 + $0x38] sm:$0xf]
      %v237 = vld [vmem:[%s1 + $0x3c] sm:$0xff]
      %v238 = vld [vmem:[%s1 + $0x44] sm:$0xf]
      %v239 = vld [vmem:[%s1 + $0x48] sm:$0x77]
      %v240 = vld [vmem:[%s1 + $0x50] sm:$0x7]
      %v244 = vunpack.c.l.b16 %v224
      %v245 = vunpack.c.l.b16 %v225
      %v246 = vunpack.c.l.b16 %v226
      %v247 = vpack.c.b16 %v245, %v244
      %v248 = vpack.c.b16 %v246, %v246
      %v263 = vunpack.c.l.b16 %v227
      %v264 = vunpack.c.h.b16 %v227
      %v265 = vunpack.c.l.b16 %v228
      %v266 = vunpack.c.l.b16 %v229
      %v267 = vunpack.c.h.b16 %v229
      %v268 = vunpack.c.l.b16 %v230
      %v269 = vunpack.c.l.b16 %v231
      %v270 = vunpack.c.h.b16 %v231
      %v271 = vunpack.c.l.b16 %v232
      %v272 = vunpack.c.l.b16 %v233
      %v273 = vunpack.c.h.b16 %v233
      %v274 = vunpack.c.l.b16 %v234
      %v275 = vunpack.c.l.b16 %v235
      %v276 = vunpack.c.h.b16 %v235
      %v277 = vunpack.c.l.b16 %v236
      %v278 = vunpack.c.l.b16 %v237
      %v279 = vunpack.c.h.b16 %v237
      %v280 = vunpack.c.l.b16 %v238
      %v281 = vunpack.c.l.b16 %v239
      %v282 = vunpack.c.h.b16 %v239
      %v283 = vunpack.c.l.b16 %v240
      %v284 = vpack.c.b16 %v266, %v263
      %v285 = vpack.c.b16 %v267, %v264
      %v286 = vpack.c.b16 %v268, %v265
      %v287 = vpack.c.b16 %v272, %v269
      %v288 = vpack.c.b16 %v273, %v270
      %v289 = vpack.c.b16 %v274, %v271
      %v290 = vpack.c.b16 %v278, %v275
      %v291 = vpack.c.b16 %v279, %v276
      %v292 = vpack.c.b16 %v280, %v277
      %v293 = vpack.c.b16 %v281, %v281
      %v294 = vpack.c.b16 %v282, %v282
      %v295 = vpack.c.b16 %v283, %v283
      %vm305 = vcmask 441344
      %v307 = vsel %vm305, %v247, 0
      %v310 = vsel %vm305, %v248, 0
      %vm312 = vcmask 1042432
      %v314 = vsel %vm312, %v293, 0
      %v317 = vsel %vm312, %v294, 0
      %v320 = vsel %vm312, %v295, 0
      %322 = vmatprep.subr.bf16.mxu0 %v285
      %323 = vmatpush1.bf16.msra.mxu0 %v284
      %324 = vmatprep.subr.bf16.mxu0 %v288
      %325 = vmatpush1.bf16.msra.mxu0 %v287
      %326 = vmatprep.subr.bf16.mxu0 %v291
      %327 = vmatpush1.bf16.msra.mxu0 %v290
      %328 = vmatprep.subr.bf16.mxu0 %v317
      %329 = vmatpush1.bf16.msra.mxu0 %v314
      %330 = vmatprep.subr.bf16.mxu0 0
      %331 = vmatpush1.bf16.msra.mxu0 0
      %332 = vmatprep.subr.bf16.mxu0 0
      %333 = vmatpush1.bf16.msra.mxu0 0
      %334 = vmatprep.subr.bf16.mxu0 0
      %335 = vmatpush1.bf16.msra.mxu0 0
      %336 = vmatprep.subr.bf16.mxu0 0
      %337 = vmatpush1.bf16.msra.mxu0 0
      %338 = vmatprep.subr.bf16.mxu0 0
      %339 = vmatpush1.bf16.msra.mxu0 0
      %340 = vmatprep.subr.bf16.mxu0 0
      %341 = vmatpush1.bf16.msra.mxu0 0
      %342 = vmatprep.subr.bf16.mxu0 0
      %343 = vmatpush1.bf16.msra.mxu0 0
      %344 = vmatprep.subr.bf16.mxu0 0
      %345 = vmatpush1.bf16.msra.mxu0 0
      %346 = vmatprep.subr.bf16.mxu0 0
      %347 = vmatpush1.bf16.msra.mxu0 0
      %348 = vmatprep.subr.bf16.mxu0 0
      %349 = vmatpush1.bf16.msra.mxu0 0
      %350 = vmatprep.subr.bf16.mxu0 0
      %351 = vmatpush1.bf16.msra.mxu0 0
      %352 = vmatprep.subr.bf16.mxu0 0
      %353 = vmatpush1.bf16.msra.mxu0 0
      %354 = vmatprep.mubr.bf16.mxu0 0
      %355 = vmatmul.mubr.bf16.gmra.mrb[0].mxu0 %v307
      %v356 = vpop.f32.mrb[0].mxu0
      %v357 = vadd.f32 0.0, %v356
      %v358 = vpop.f32.mrb[0].mxu0
      %v359 = vadd.f32 0.0, %v358
      %v360 = vpop.f32.mrb[0].mxu0
      %v361 = vadd.f32 0.0, %v360
      %v362 = vpop.f32.mrb[0].mxu0
      %v363 = vadd.f32 0.0, %v362
      %364 = vmatprep.mubr.bf16.mxu0 0
      %365 = vmatmul.mubr.bf16.gmra.mrb[0].mxu0 %v310
      %v366 = vpop.f32.mrb[0].mxu0
      %v367 = vpop.f32.mrb[0].mxu0
      %v368 = vadd.f32 0.0, %v367
      %v369 = vpop.f32.mrb[0].mxu0
      %v370 = vpop.f32.mrb[0].mxu0
      %371 = vdwg.mxu0
      %372 = vmatprep.subr.bf16.mxu0 0
      %373 = vmatpush1.bf16.msra.mxu0 %v286
      %374 = vmatprep.subr.bf16.mxu0 0
      %375 = vmatpush1.bf16.msra.mxu0 %v289
      %376 = vmatprep.subr.bf16.mxu0 0
      %377 = vmatpush1.bf16.msra.mxu0 %v292
      %378 = vmatprep.subr.bf16.mxu0 0
      %379 = vmatpush1.bf16.msra.mxu0 %v320
      %380 = vmatprep.subr.bf16.mxu0 0
      %381 = vmatpush1.bf16.msra.mxu0 0
      %382 = vmatprep.subr.bf16.mxu0 0
      %383 = vmatpush1.bf16.msra.mxu0 0
      %384 = vmatprep.subr.bf16.mxu0 0
      %385 = vmatpush1.bf16.msra.mxu0 0
      %386 = vmatprep.subr.bf16.mxu0 0
      %387 = vmatpush1.bf16.msra.mxu0 0
      %388 = vmatprep.subr.bf16.mxu0 0
      %389 = vmatpush1.bf16.msra.mxu0 0
      %390 = vmatprep.subr.bf16.mxu0 0
      %391 = vmatpush1.bf16.msra.mxu0 0
      %392 = vmatprep.subr.bf16.mxu0 0
      %393 = vmatpush1.bf16.msra.mxu0 0
      %394 = vmatprep.subr.bf16.mxu0 0
      %395 = vmatpush1.bf16.msra.mxu0 0
      %396 = vmatprep.subr.bf16.mxu0 0
      %397 = vmatpush1.bf16.msra.mxu0 0
      %398 = vmatprep.subr.bf16.mxu0 0
      %399 = vmatpush1.bf16.msra.mxu0 0
      %400 = vmatprep.subr.bf16.mxu0 0
      %401 = vmatpush1.bf16.msra.mxu0 0
      %402 = vmatprep.subr.bf16.mxu0 0
      %403 = vmatpush1.bf16.msra.mxu0 0
      %404 = vmatprep.mubr.bf16.mxu0 0
      %405 = vmatmul.mubr.bf16.gmra.mrb[0].mxu0 %v307
      %v406 = vpop.f32.mrb[0].mxu0
      %v407 = vadd.f32 0.0, %v406
      %v408 = vpop.f32.mrb[0].mxu0
      %v409 = vpop.f32.mrb[0].mxu0
      %v410 = vadd.f32 0.0, %v409
      %v411 = vpop.f32.mrb[0].mxu0
      %412 = vmatprep.mubr.bf16.mxu0 0
      %413 = vmatmul.mubr.bf16.gmra.mrb[0].mxu0 %v310
      %v414 = vpop.f32.mrb[0].mxu0
      %v415 = vadd.f32 0.0, %v414
      %v416 = vpop.f32.mrb[0].mxu0
      %v417 = vpop.f32.mrb[0].mxu0
      %v418 = vpop.f32.mrb[0].mxu0
      %419 = vdwg.mxu0
      %vm423 = vcmask 1046528
      %v424 = vrot.slane %v359, 1
      %v425 = vrot.slane %v363, 1
      %v426 = vsel %vm423, %v424, %v425
      %v427 = vrot.slane %v368, 1
      %v428 = vsel %vm423, %v425, %v427
      %v431 = vadd.f32 %v357, %v426
      %v432 = vadd.f32 %v361, %v428
      %vm436 = vcmask 1045504
      %v437 = vrot.slane %v407, 2
      %v438 = vrot.slane %v410, 2
      %v439 = vsel %vm436, %v437, %v438
      %v440 = vrot.slane %v415, 2
      %v441 = vsel %vm436, %v438, %v440
      %v444 = vadd.f32 %v431, %v439
      %v445 = vadd.f32 %v432, %v441
      %448 = vrot.lane.b32.xlu0 %v444, 64
      %v449 = vpop.permute.xlu0 %448
      %450 = vrot.lane.b32.xlu0 %v445, 64
      %v451 = vpop.permute.xlu0 %450
      %v454 = vmax.f32 %v444, %v449
      %v455 = vmax.f32 %v445, %v451
      %vm456 = vcmask 523264
      %457 = vst.msk [vmem:[#allocation2] sm:$0xff] %vm456, %v454
      %458 = vst.msk [vmem:[#allocation2 + $0x8] sm:$0xff] %vm456, %v455
      %v459 = vld [vmem:[#allocation2] ss:$2 sm:$0xff]
      %s460 = scalar_lea.vmem [#allocation2], 1
      %v461 = vld [vmem:[%s460] ss:$2 sm:$0xff]
      %v462 = vmax.f32 %v459, %v461
      %v463 = vld [vmem:[%s2] sm:$0x1]
      %v465 = vlaneseq
      %v466 = vshrl.u32 %v465, 7
      %v467 = vsub.s32 0, %v466
      %v468 = vrot.slane %v463, %v467
      %v470 = vadd.f32 %v462, %v468
      %v471 = vmax.f32 %v470, 0.0
      %vm472 = vcmask 654336
      %473 = vst.msk [vmem:[#allocation3] sm:$0xff] %vm472, 0.0
      %vm474 = vcmask 648192
      %475 = vst.msk [vmem:[#allocation3 + $0x8] sm:$0x3] %vm474, 0.0
      %477 = vrot.lane.b32.xlu0 %v471, 8
      %v478 = vpop.permute.xlu0 %477
      %vm480 = vcmask 588864
      %481 = vst.msk [vmem:[#allocation3 + $0x1] sm:$0xff] %vm480, %v478
      %v482 = vld [vmem:[#allocation3] sm:$0xff]
      %v483 = vld [vmem:[#allocation3 + $0x8] sm:$0x3]
      %v484 = vpack.c.bf16 %v483, %v482
      %v485 = vld [vmem:[%s3] sm:$0xff]
      %v486 = vld [vmem:[%s3 + $0x8] sm:$0xf]
      %v487 = vld [vmem:[%s3 + $0xc] sm:$0xff]
      %v488 = vld [vmem:[%s3 + $0x14] sm:$0xf]
      %v489 = vld [vmem:[%s3 + $0x18] sm:$0xff]
      %v490 = vld [vmem:[%s3 + $0x20] sm:$0xf]
      %v491 = vld [vmem:[%s3 + $0x24] sm:$0xff]
      %v492 = vld [vmem:[%s3 + $0x2c] sm:$0xf]
      %v493 = vld [vmem:[%s3 + $0x30] sm:$0xff]
      %v494 = vld [vmem:[%s3 + $0x38] sm:$0xf]
      %v495 = vld [vmem:[%s3 + $0x3c] sm:$0xff]
      %v496 = vld [vmem:[%s3 + $0x44] sm:$0xf]
      %v497 = vld [vmem:[%s3 + $0x48] sm:$0xff]
      %v498 = vld [vmem:[%s3 + $0x50] sm:$0xf]
      %v499 = vld [vmem:[%s3 + $0x54] sm:$0xff]
      %v500 = vld [vmem:[%s3 + $0x5c] sm:$0xf]
      %v501 = vld [vmem:[%s3 + $0x60] sm:$0xff]
      %v502 = vld [vmem:[%s3 + $0x68] sm:$0xf]
      %v503 = vld [vmem:[%s3 + $0x6c] sm:$0xff]
      %v504 = vld [vmem:[%s3 + $0x74] sm:$0xf]
      %v525 = vunpack.c.l.b16 %v485
      %v526 = vunpack.c.h.b16 %v485
      %v527 = vunpack.c.l.b16 %v486
      %v528 = vunpack.c.l.b16 %v487
      %v529 = vunpack.c.h.b16 %v487
      %v530 = vunpack.c.l.b16 %v488
      %v531 = vunpack.c.l.b16 %v489
      %v532 = vunpack.c.h.b16 %v489
      %v533 = vunpack.c.l.b16 %v490
      %v534 = vunpack.c.l.b16 %v491
      %v535 = vunpack.c.h.b16 %v491
      %v536 = vunpack.c.l.b16 %v492
      %v537 = vunpack.c.l.b16 %v493
      %v538 = vunpack.c.h.b16 %v493
      %v539 = vunpack.c.l.b16 %v494
      %v540 = vunpack.c.l.b16 %v495
      %v541 = vunpack.c.h.b16 %v495
      %v542 = vunpack.c.l.b16 %v496
      %v543 = vunpack.c.l.b16 %v497
      %v544 = vunpack.c.h.b16 %v497
      %v545 = vunpack.c.l.b16 %v498
      %v546 = vunpack.c.l.b16 %v499
      %v547 = vunpack.c.h.b16 %v499
      %v548 = vunpack.c.l.b16 %v500
      %v549 = vunpack.c.l.b16 %v501
      %v550 = vunpack.c.h.b16 %v501
      %v551 = vunpack.c.l.b16 %v502
      %v552 = vunpack.c.l.b16 %v503
      %v553 = vunpack.c.h.b16 %v503
      %v554 = vunpack.c.l.b16 %v504
      %v555 = vpack.c.b16 %v528, %v525
      %v556 = vpack.c.b16 %v529, %v526
      %v557 = vpack.c.b16 %v530, %v527
      %v558 = vpack.c.b16 %v534, %v531
      %v559 = vpack.c.b16 %v535, %v532
      %v560 = vpack.c.b16 %v536, %v533
      %v561 = vpack.c.b16 %v540, %v537
      %v562 = vpack.c.b16 %v541, %v538
      %v563 = vpack.c.b16 %v542, %v539
      %v564 = vpack.c.b16 %v546, %v543
      %v565 = vpack.c.b16 %v547, %v544
      %v566 = vpack.c.b16 %v548, %v545
      %v567 = vpack.c.b16 %v552, %v549
      %v568 = vpack.c.b16 %v553, %v550
      %v569 = vpack.c.b16 %v554, %v551
      %v586 = vsel %vm472, %v484, 0
      %588 = vmatprep.subr.bf16.mxu0 %v556
      %589 = vmatpush1.bf16.msra.mxu0 %v555
      %590 = vmatprep.subr.bf16.mxu0 %v559
      %591 = vmatpush1.bf16.msra.mxu0 %v558
      %592 = vmatprep.subr.bf16.mxu0 %v562
      %593 = vmatpush1.bf16.msra.mxu0 %v561
      %594 = vmatprep.subr.bf16.mxu0 %v565
      %595 = vmatpush1.bf16.msra.mxu0 %v564
      %596 = vmatprep.subr.bf16.mxu0 %v568
      %597 = vmatpush1.bf16.msra.mxu0 %v567
      %598 = vmatprep.subr.bf16.mxu0 0
      %599 = vmatpush1.bf16.msra.mxu0 0
      %600 = vmatprep.subr.bf16.mxu0 0
      %601 = vmatpush1.bf16.msra.mxu0 0
      %602 = vmatprep.subr.bf16.mxu0 0
      %603 = vmatpush1.bf16.msra.mxu0 0
      %604 = vmatprep.subr.bf16.mxu0 0
      %605 = vmatpush1.bf16.msra.mxu0 0
      %606 = vmatprep.subr.bf16.mxu0 0
      %607 = vmatpush1.bf16.msra.mxu0 0
      %608 = vmatprep.subr.bf16.mxu0 0
      %609 = vmatpush1.bf16.msra.mxu0 0
      %610 = vmatprep.subr.bf16.mxu0 0
      %611 = vmatpush1.bf16.msra.mxu0 0
      %612 = vmatprep.subr.bf16.mxu0 0
      %613 = vmatpush1.bf16.msra.mxu0 0
      %614 = vmatprep.subr.bf16.mxu0 0
      %615 = vmatpush1.bf16.msra.mxu0 0
      %616 = vmatprep.subr.bf16.mxu0 0
      %617 = vmatpush1.bf16.msra.mxu0 0
      %618 = vmatprep.subr.bf16.mxu0 0
      %619 = vmatpush1.bf16.msra.mxu0 0
      %620 = vmatprep.mubr.bf16.mxu0 0
      %621 = vmatmul.mubr.bf16.gmra.mrb[0].mxu0 %v586
      %v622 = vpop.f32.mrb[0].mxu0
      %v623 = vadd.f32 0.0, %v622
      %v624 = vpop.f32.mrb[0].mxu0
      %v625 = vadd.f32 0.0, %v624
      %v626 = vpop.f32.mrb[0].mxu0
      %v627 = vpop.f32.mrb[0].mxu0
      %v628 = vadd.f32 0.0, %v627
      %629 = vdwg.mxu0
      %630 = vmatprep.subr.bf16.mxu0 0
      %631 = vmatpush1.bf16.msra.mxu0 %v557
      %632 = vmatprep.subr.bf16.mxu0 0
      %633 = vmatpush1.bf16.msra.mxu0 %v560
      %634 = vmatprep.subr.bf16.mxu0 0
      %635 = vmatpush1.bf16.msra.mxu0 %v563
      %636 = vmatprep.subr.bf16.mxu0 0
      %637 = vmatpush1.bf16.msra.mxu0 %v566
      %638 = vmatprep.subr.bf16.mxu0 0
      %639 = vmatpush1.bf16.msra.mxu0 %v569
      %640 = vmatprep.subr.bf16.mxu0 0
      %641 = vmatpush1.bf16.msra.mxu0 0
      %642 = vmatprep.subr.bf16.mxu0 0
      %643 = vmatpush1.bf16.msra.mxu0 0
      %644 = vmatprep.subr.bf16.mxu0 0
      %645 = vmatpush1.bf16.msra.mxu0 0
      %646 = vmatprep.subr.bf16.mxu0 0
      %647 = vmatpush1.bf16.msra.mxu0 0
      %648 = vmatprep.subr.bf16.mxu0 0
      %649 = vmatpush1.bf16.msra.mxu0 0
      %650 = vmatprep.subr.bf16.mxu0 0
      %651 = vmatpush1.bf16.msra.mxu0 0
      %652 = vmatprep.subr.bf16.mxu0 0
      %653 = vmatpush1.bf16.msra.mxu0 0
      %654 = vmatprep.subr.bf16.mxu0 0
      %655 = vmatpush1.bf16.msra.mxu0 0
      %656 = vmatprep.subr.bf16.mxu0 0
      %657 = vmatpush1.bf16.msra.mxu0 0
      %658 = vmatprep.subr.bf16.mxu0 0
      %659 = vmatpush1.bf16.msra.mxu0 0
      %660 = vmatprep.subr.bf16.mxu0 0
      %661 = vmatpush1.bf16.msra.mxu0 0
      %662 = vmatprep.mubr.bf16.mxu0 0
      %663 = vmatmul.mubr.bf16.gmra.mrb[0].mxu0 %v586
      %v664 = vpop.f32.mrb[0].mxu0
      %v665 = vadd.f32 0.0, %v664
      %v666 = vpop.f32.mrb[0].mxu0
      %v667 = vpop.f32.mrb[0].mxu0
      %v668 = vadd.f32 0.0, %v667
      %v669 = vpop.f32.mrb[0].mxu0
      %670 = vdwg.mxu0
      %v673 = vrot.slane %v625, 1
      %v674 = vrot.slane %v628, 1
      %v675 = vsel %vm423, %v673, %v674
      %v677 = vadd.f32 %v623, %v675
      %v680 = vrot.slane %v665, 2
      %v681 = vrot.slane %v668, 2
      %v682 = vsel %vm436, %v680, %v681
      %v684 = vadd.f32 %v677, %v682
      %686 = vrot.lane.b32.xlu0 %v684, 64
      %v687 = vpop.permute.xlu0 %686
      %v689 = vmax.f32 %v684, %v687
      %690 = vst.msk [vmem:[#allocation2] sm:$0xff] %vm456, %v689
      %v691 = vld [vmem:[#allocation2] ss:$2 sm:$0xf]
      %v692 = vld [vmem:[%s460] ss:$2 sm:$0xf]
      %v693 = vmax.f32 %v691, %v692
      %v694 = vld [vmem:[%s4] sm:$0x1]
      %v696 = vlaneseq
      %v697 = vshrl.u32 %v696, 7
      %v698 = vsub.s32 0, %v697
      %v699 = vrot.slane %v694, %v698
      %v701 = vadd.f32 %v693, %v699
      %v702 = vmax.f32 %v701, 0.0
      %vm703 = vcmask 519168
      %704 = vst.msk [vmem:[%s222] sm:$0xf] %vm703, %v702
      %p705 = scmp.lt.s32.totalorder %s16, 1
      %s706 = scalar_select %p705, %s16, 1
      %s707 = smul.addr %s706, 4
      %s708 = scalar_lea.vmem %s5, %s707
      // Predicated region
      $region41: #{forward.1} parent=39 // pred_check
        %p709 = pneg %p144
      $region42: #{forward.1} parent=39 // pred_check_branch
        %711 = sbr.rel (%p709) target = $region44
      $region43: #{forward.1} parent=39 // pred_region
        _
      $region44: #{forward.1} parent=39 // pred_fallthru
        _
    $region40: #{forward.1} parent=5 // pred_fallthru
      _
    %p712 = scmp.le.s32.totalorder 2, %s11
    // Predicated region
    $region45: #{forward.1} parent=5 // pred_check
      %p713 = pneg %p712
    $region46: #{forward.1} parent=5 // pred_check_branch
      %715 = sbr.rel (%p713) target = $region48
    $region47: #{forward.1} parent=5 // pred_region
      %s716 = ssub.s32 %s11, 2
      // Predicated region
      $region49: #{forward.1} parent=47 // pred_check
        %p717 = pneg %p150
      $region50: #{forward.1} parent=47 // pred_check_branch
        %719 = sbr.rel (%p717) target = $region52
      $region51: #{forward.1} parent=47 // pred_region
        %p720 = scmp.lt.s32.totalorder %s17, 1
        %s721 = scalar_select %p720, %s17, 1
        %s722 = smul.addr %s721, 4
        %s723 = scalar_lea.vmem %s5, %s722
      $region52: #{forward.1} parent=47 // pred_fallthru
        _
    $region48: #{forward.1} parent=5 // pred_fallthru
      _
  $region6: #{forward.1} parent=0 // loop_footer
    %s15 = sadd.s32 1, %s11
  $region7: #{forward.1} parent=0 // loop_footer_branch
    %10 = sbr.rel target = $region3
  $region8: #{forward.1} parent=0 // loop_exit
    _

</llo_original>
